<compile_context>
chip_gen: v7x
topology: tpu7x:2x2x1
jax: 0.10.0
libtpu: 0.0.40
codegen_flags: <defaults>
</compile_context>

<pallas_src>
import numpy as np
import jax
import jax.numpy as jnp
from jax.experimental import pallas as pl
from jax.experimental.pallas import tpu as pltpu

# ----------------------- small synthetic configuration -----------------------
BS = 2
IN_CH = 1
ROI = (16, 16, 16)                                    # roi_size
PATCH = (4, 4, 4)                                     # patch_size
FEAT = tuple(int(r // p) for r, p in zip(ROI, PATCH)) # feat_shape = roi/patch
EMBED = 768                                           # SAM/ViT embed dim
CLIP_DIM = 512                                        # CLIP pooler dim
N_TOK = FEAT[0] * FEAT[1] * FEAT[2]                   # number of image tokens (V)
PATCH_DIM = IN_CH * PATCH[0] * PATCH[1] * PATCH[2]    # flattened patch size


# ------------------------------ Pallas kernels -------------------------------
def _linear_kernel(x_ref, w_ref, b_ref, o_ref):
    # bf16 MXU operands, f32 accumulation.
    o_ref[...] = (
        jnp.dot(
            x_ref[...].astype(jnp.bfloat16),
            w_ref[...],
            preferred_element_type=jnp.float32,
        )
        + b_ref[...]
    )


def pl_linear(x, w_bf16, b, tm=None):
    """y = x @ w + b (f32 out), tiled over M with a parallel grid axis."""
    M, K = x.shape
    N = w_bf16.shape[1]
    if tm is None:
        tm = M
    assert M % tm == 0, f"M={M} must be divisible by tm={tm}"
    return pl.pallas_call(
        _linear_kernel,
        out_shape=jax.ShapeDtypeStruct((M, N), jnp.float32),
        grid=(M // tm,),
        in_specs=[
            pl.BlockSpec((tm, K), lambda i: (i, 0)),
            pl.BlockSpec((K, N), lambda i: (0, 0)),
            pl.BlockSpec((1, N), lambda i: (0, 0)),
        ],
        out_specs=pl.BlockSpec((tm, N), lambda i: (i, 0)),
        compiler_params=pltpu.CompilerParams(dimension_semantics=("parallel",)),
    )(x, w_bf16, b.reshape(1, N))


def _patch_embed_kernel(x_ref, w_ref, b_ref, dpe_ref, o_ref):
    """Patch embedding with (no_mask dense embed + positional enc) epilogue.

    x_ref   : (1, tok, PATCH_DIM) f32
    w_ref   : (PATCH_DIM, EMBED)  bf16
    b_ref   : (1, EMBED)          f32
    dpe_ref : (tok, EMBED)        bf16  (no_mask_embed + dense PE, token-major)
    o_ref   : (1, tok, EMBED)     bf16  (token-major, lane-dense 768 cols)
    """
    emb = jnp.dot(x_ref[0].astype(jnp.bfloat16), w_ref[...],
                  preferred_element_type=jnp.float32)
    emb = emb + b_ref[...] + dpe_ref[...].astype(jnp.float32)
    o_ref[0] = emb.astype(jnp.bfloat16)


def pl_patch_embed(patches, w_bf16, b, dpe_bf16, tok_tile=None):
    B, T, K = patches.shape
    N = w_bf16.shape[1]
    if tok_tile is None:
        tok_tile = T
    assert T % tok_tile == 0, f"T={T} must be divisible by tok_tile={tok_tile}"
    return pl.pallas_call(
        _patch_embed_kernel,
        out_shape=jax.ShapeDtypeStruct((B, T, N), jnp.bfloat16),
        grid=(B, T // tok_tile),
        in_specs=[
            pl.BlockSpec((1, tok_tile, K), lambda bi, ti: (bi, ti, 0)),
            pl.BlockSpec((K, N), lambda bi, ti: (0, 0)),
            pl.BlockSpec((1, N), lambda bi, ti: (0, 0)),
            pl.BlockSpec((tok_tile, N), lambda bi, ti: (ti, 0)),
        ],
        out_specs=pl.BlockSpec((1, tok_tile, N), lambda bi, ti: (bi, ti, 0)),
        compiler_params=pltpu.CompilerParams(
            dimension_semantics=("parallel", "parallel")),
    )(patches, w_bf16, b.reshape(1, N), dpe_bf16)


def _decoder_kernel(mw_ref, img_ref, interp_ref, o_ref):
    """Fused mask decode: per-row channel contraction + batched trilinear interp.

    mw_ref     : (B, 1, C)  f32   fused (dim_align o hypernet) mask weights
    img_ref    : (B, V, C)  bf16  token-major image embedding (dpe already added)
    interp_ref : (V, n_out) bf16  trilinear-interp matrix (pre-transposed)
    o_ref      : (B, n_out) f32   logits, lane-dense last dim (n_out % 128 == 0)
    """
    B = mw_ref.shape[0]
    rows = []
    for b in range(B):                             # static unroll, B is tiny
        low_b = jax.lax.dot_general(
            mw_ref[b].astype(jnp.bfloat16),        # (1, C)
            img_ref[b],                            # (V, C)
            dimension_numbers=(((1,), (1,)), ((), ())),
            preferred_element_type=jnp.float32,
        )                                          # (1, V)
        rows.append(low_b)
    low = jnp.concatenate(rows, axis=0)            # (B, V) f32
    # one batched interp matmul: the interp RHS streams through the MXU once
    o_ref[...] = jnp.dot(low.astype(jnp.bfloat16), interp_ref[...],
                         preferred_element_type=jnp.float32)


def pl_fused_decoder(mask_w, img_dpe, interp_t):
    B, _, C = mask_w.shape
    V = img_dpe.shape[1]
    n_out = interp_t.shape[1]
    return pl.pallas_call(
        _decoder_kernel,
        out_shape=jax.ShapeDtypeStruct((B, n_out), jnp.float32),
        grid=(1,),                                  # whole batch in one step
        in_specs=[
            pl.BlockSpec((B, 1, C), lambda i: (0, 0, 0)),
            pl.BlockSpec((B, V, C), lambda i: (0, 0, 0)),
            pl.BlockSpec((V, n_out), lambda i: (0, 0)),
        ],
        out_specs=pl.BlockSpec((B, n_out), lambda i: (0, 0)),
        compiler_params=pltpu.CompilerParams(dimension_semantics=("arbitrary",)),
    )(mask_w, img_dpe, interp_t)


# --------------------------- glue / parameter setup ---------------------------
def linear_interp_matrix(out_size, in_size):
    """PyTorch F.interpolate(mode='linear', align_corners=False) as a matrix."""
    o = np.arange(out_size, dtype=np.float64)
    src = np.maximum((o + 0.5) * (in_size / out_size) - 0.5, 0.0)
    i0 = np.floor(src).astype(np.int64)
    i0 = np.minimum(i0, in_size - 1)
    i1 = np.minimum(i0 + 1, in_size - 1)
    lam = src - i0
    W = np.zeros((out_size, in_size), dtype=np.float64)
    W[np.arange(out_size), i0] += 1.0 - lam
    W[np.arange(out_size), i1] += lam
    return W


def clip_pooler_stub(texts, key):
    # TODO(synk): CLIPTextModel + AutoTokenizer cannot be reproduced in-script;
    # pooler_output is replaced by deterministic per-prompt features.
    feats = []
    for t in texts:
        prompt = "A computerized tomography of a {}.".format(t)
        seed = sum(ord(c) for c in prompt) % (2**31 - 1)
        feats.append(
            jax.random.normal(jax.random.fold_in(key, seed), (CLIP_DIM,), jnp.float32)
        )
    return jnp.stack(feats, axis=0)


class SegVolPallas:
    def __init__(self, key):
        ks = jax.random.split(key, 10)
        s = 0.02
        # image_encoder (patch embedding stand-in) -- weight stored bf16
        self.w_patch = (s * jax.random.normal(ks[0], (PATCH_DIM, EMBED), jnp.float32)
                        ).astype(jnp.bfloat16)
        self.b_patch = s * jax.random.normal(ks[1], (EMBED,), jnp.float32)
        # text_encoder.dim_align : Linear(512, 768)
        w_align = s * jax.random.normal(ks[2], (CLIP_DIM, EMBED), jnp.float32)
        b_align = s * jax.random.normal(ks[3], (EMBED,), jnp.float32)
        # prompt_encoder
        no_mask_embed = s * jax.random.normal(ks[4], (EMBED,), jnp.float32)
        pe_gaussian = jax.random.normal(ks[5], (3, EMBED // 2), jnp.float32)
        # mask_decoder hypernetwork stand-in (Linear 768 -> 768)
        w_hyper = s * jax.random.normal(ks[6], (EMBED, EMBED), jnp.float32)
        b_hyper = s * jax.random.normal(ks[7], (EMBED,), jnp.float32)
        self.text_key = ks[8]
        self.feat_shape = np.array(ROI) / np.array(PATCH)

        # Fold dim_align and the hypernet into one (512,768) weight + bias so
        # the decoder never touches the 768x768 weight and the text path is a
        # single tiny pl_linear call.
        # TODO(synk): only valid because both stand-ins are linear; the real
        # SAM hypernetwork is an MLP with nonlinearities -- undo this fusion
        # when the real modules are injected.
        self.w_text2mask = (w_align @ w_hyper).astype(jnp.bfloat16)      # (512, 768)
        self.b_text2mask = b_align @ w_hyper + b_hyper                   # (768,)

        # (no_mask dense embedding + dense positional encoding), token-major,
        # bf16; folded into the patch-embed kernel epilogue.
        dense_pe = self._compute_dense_pe(pe_gaussian)                   # (N_TOK, 768)
        self.dense_plus_pe = (dense_pe + no_mask_embed[None, :]).astype(jnp.bfloat16)

        # trilinear interpolation (align_corners=False) as one Kronecker
        # matrix, precomputed ALREADY TRANSPOSED, stored bf16.
        # TODO(synk): at real SegVol volumes replace the dense Kronecker matrix
        # with three separable per-axis matmuls (O(V*n_out) does not fit VMEM,
        # especially v7x's 64 MiB).
        Wd = linear_interp_matrix(ROI[0], FEAT[0])
        Wh = linear_interp_matrix(ROI[1], FEAT[1])
        Ww = linear_interp_matrix(ROI[2], FEAT[2])
        self.interp_M_T = jnp.asarray(
            np.kron(Wd, np.kron(Wh, Ww)).T, dtype=jnp.bfloat16
        )  # (V, Do*Ho*Wo)

    @staticmethod
    def _compute_dense_pe(pe_gaussian):
        f0, f1, f2 = FEAT
        gd = (jnp.arange(f0, dtype=jnp.float32) + 0.5) / f0
        gh = (jnp.arange(f1, dtype=jnp.float32) + 0.5) / f1
        gw = (jnp.arange(f2, dtype=jnp.float32) + 0.5) / f2
        coords = jnp.stack(jnp.meshgrid(gd, gh, gw, indexing="ij"), axis=-1)  # (f0,f1,f2,3)
        proj = (2.0 * coords - 1.0) @ pe_gaussian                             # (f0,f1,f2,384)
        proj = 2.0 * jnp.pi * proj
        pe = jnp.concatenate([jnp.sin(proj), jnp.cos(proj)], axis=-1)         # (f0,f1,f2,768)
        return pe.reshape(N_TOK, EMBED)                                       # token-major

    # ----- image_encoder stand-in: patch extraction + fused Pallas patch-embed -----
    def image_encoder(self, image):
        B = image.shape[0]
        fd, fh, fw = FEAT
        pd, ph, pw = PATCH
        # TODO(synk): at real SegVol scale this host-graph patch rearrangement
        # should become a strided in-kernel DMA (memory_space=pl.ANY +
        # make_async_copy / index_map walk) instead of an XLA reshape/transpose.
        x = image.reshape(B, IN_CH, fd, pd, fh, ph, fw, pw)
        x = jnp.transpose(x, (0, 2, 4, 6, 1, 3, 5, 7))      # (B, fd, fh, fw, C, pd, ph, pw)
        patches = x.reshape(B, N_TOK, PATCH_DIM)
        # token-major bf16 output, bias + (no_mask + dense PE) fused in epilogue.
        return pl_patch_embed(patches, self.w_patch, self.b_patch,
                              self.dense_plus_pe)            # (B, N_TOK, EMBED) bf16

    # ----- TextEncoder.forward + hypernet, fused (see __init__) -----
    def text_to_mask_weights(self, text):
        if text is None:
            return None
        if isinstance(text, str):
            text = [text]
        pooler = clip_pooler_stub(text, self.text_key)                  # (n_text, 512)
        return pl_linear(pooler, self.w_text2mask, self.b_text2mask)    # (n_text, 768)

    # ----- SegVol.forward_decoder (fused channel contraction -> batched interp) -----
    def forward_decoder(self, image_embedding, img_shape, text=None, boxes=None, points=None):
        if boxes is not None and boxes.ndim == 2:
            boxes = boxes[:, None, :]
        # TODO(synk): points/boxes prompt paths need SAM's prompt encoder; only
        # the text-prompt path is implemented here.
        mask_w = self.text_to_mask_weights(text)                        # (bs, 768)
        bs = image_embedding.shape[0]
        logits = pl_fused_decoder(
            mask_w.reshape(bs, 1, EMBED),
            image_embedding,            # (bs, N_TOK, EMBED) bf16, token-major
            self.interp_M_T,
        )                                                               # (bs, Do*Ho*Wo)
        return logits.reshape(bs, 1, *img_shape)

    # ----- SegVol.forward (test_mode=True path) -----
    def forward(self, image, text=None, boxes=None, points=None):
        bs = image.shape[0]
        img_shape = (image.shape[2], image.shape[3], image.shape[4])
        image_embedding = self.image_encoder(image)                     # (bs, N, C)
        # NOTE: the PyTorch transpose(1,2).view(bs, C, fd, fh, fw) is a pure
        # layout shuffle; the fused decoder consumes the token-major layout
        # directly, so the (B, 768, V) HBM round-trip is elided.
        return self.forward_decoder(image_embedding, img_shape, text, boxes, points)


# ----------------------------------- main ------------------------------------
if __name__ == "__main__":
    key = jax.random.PRNGKey(0)
    model = SegVolPallas(key)

    image = jax.random.normal(jax.random.fold_in(key, 1234),
                              (BS, IN_CH) + ROI, dtype=jnp.float32)
    text = ["liver", "kidney"]

    logits = model.forward(image, text=text, boxes=None, points=None)
    logits = jax.block_until_ready(logits)

    assert logits.shape == (BS, 1) + ROI, logits.shape
    assert bool(jnp.all(jnp.isfinite(logits)))
    print("KERNEL_OK")
</pallas_src>

<mosaic_0001>
module attributes {stable_mosaic.version = 11 : i64} {
  func.func @_patch_embed_kernel(%arg0: i32, %arg1: i32, %arg2: memref<1x64x64xf32, #tpu.memory_space<vmem>>, %arg3: memref<64x768xbf16, #tpu.memory_space<vmem>>, %arg4: memref<1x768xf32, #tpu.memory_space<vmem>>, %arg5: memref<64x768xbf16, #tpu.memory_space<vmem>>, %arg6: memref<1x64x768xbf16, #tpu.memory_space<vmem>>) attributes {dimension_semantics = [#tpu.dimension_semantics<parallel>, #tpu.dimension_semantics<parallel>], iteration_bounds = array<i64: 2, 1>, scalar_prefetch = 0 : i64, scratch_operands = 0 : i64, tpu.core_type = #tpu.core_type<tc>, window_params = [{transform_indices = @transform_0, window_bounds = array<i64: 1, 64, 64>}, {pipeline_mode = #tpu.pipeline_mode<synchronous>, transform_indices = @transform_1, window_bounds = array<i64: 64, 768>}, {pipeline_mode = #tpu.pipeline_mode<synchronous>, transform_indices = @transform_2, window_bounds = array<i64: 1, 768>}, {transform_indices = @transform_3, window_bounds = array<i64: 64, 768>}, {transform_indices = @transform_4, window_bounds = array<i64: 1, 64, 768>}]} {
    %c0 = arith.constant 0 : index
    %c0_0 = arith.constant 0 : index
    %c0_1 = arith.constant 0 : index
    %0 = vector.load %arg2[%c0, %c0_0, %c0_1] : memref<1x64x64xf32, #tpu.memory_space<vmem>>, vector<1x64x64xf32>
    %1 = vector.shape_cast %0 : vector<1x64x64xf32> to vector<64x64xf32>
    %2 = arith.truncf %1 : vector<64x64xf32> to vector<64x64xbf16>
    %c0_2 = arith.constant 0 : index
    %c0_3 = arith.constant 0 : index
    %3 = vector.load %arg3[%c0_2, %c0_3] : memref<64x768xbf16, #tpu.memory_space<vmem>>, vector<64x768xbf16>
    %cst = arith.constant dense<0.000000e+00> : vector<64x768xf32>
    %4 = tpu.matmul %2, %3, %cst {dimension_numbers = #tpu.dot_dimension_numbers<[1], [0], [0], [1], [0, 0, 1, 1], [], []>} : vector<64x64xbf16>, vector<64x768xbf16>, vector<64x768xf32> -> vector<64x768xf32>
    %c0_4 = arith.constant 0 : index
    %c0_5 = arith.constant 0 : index
    %5 = vector.load %arg4[%c0_4, %c0_5] : memref<1x768xf32, #tpu.memory_space<vmem>>, vector<1x768xf32>
    %6 = vector.broadcast %5 : vector<1x768xf32> to vector<64x768xf32>
    %7 = arith.addf %4, %6 : vector<64x768xf32>
    %c0_6 = arith.constant 0 : index
    %c0_7 = arith.constant 0 : index
    %8 = vector.load %arg5[%c0_6, %c0_7] : memref<64x768xbf16, #tpu.memory_space<vmem>>, vector<64x768xbf16>
    %9 = arith.extf %8 : vector<64x768xbf16> to vector<64x768xf32>
    %10 = arith.addf %7, %9 : vector<64x768xf32>
    %11 = arith.truncf %10 : vector<64x768xf32> to vector<64x768xbf16>
    %c0_8 = arith.constant 0 : index
    %c0_9 = arith.constant 0 : index
    %c0_10 = arith.constant 0 : index
    %12 = vector.load %arg6[%c0_8, %c0_9, %c0_10] : memref<1x64x768xbf16, #tpu.memory_space<vmem>>, vector<1x64x768xbf16>
    %13 = vector.shape_cast %12 : vector<1x64x768xbf16> to vector<64x768xbf16>
    %14 = vector.shape_cast %11 : vector<64x768xbf16> to vector<1x64x768xbf16>
    tpu.vector_store %arg6[%c0_8, %c0_9, %c0_10], %14 {strides = array<i32>} : memref<1x64x768xbf16, #tpu.memory_space<vmem>>, vector<1x64x768xbf16>,
    return
  }
  func.func @transform_0(%arg0: i32, %arg1: i32) -> (i32, i32, i32) {
    %c0_i32 = arith.constant 0 : i32
    %c0_i32_0 = arith.constant 0 : i32
    return %arg0, %arg1, %c0_i32 : i32, i32, i32
  }
  func.func @transform_1(%arg0: i32, %arg1: i32) -> (i32, i32) {
    %c0_i32 = arith.constant 0 : i32
    %c0_i32_0 = arith.constant 0 : i32
    %c0_i32_1 = arith.constant 0 : i32
    return %c0_i32, %c0_i32_0 : i32, i32
  }
  func.func @transform_2(%arg0: i32, %arg1: i32) -> (i32, i32) {
    %c0_i32 = arith.constant 0 : i32
    %c0_i32_0 = arith.constant 0 : i32
    %c0_i32_1 = arith.constant 0 : i32
    return %c0_i32, %c0_i32_0 : i32, i32
  }
  func.func @transform_3(%arg0: i32, %arg1: i32) -> (i32, i32) {
    %c0_i32 = arith.constant 0 : i32
    %c0_i32_0 = arith.constant 0 : i32
    return %arg1, %c0_i32 : i32, i32
  }
  func.func @transform_4(%arg0: i32, %arg1: i32) -> (i32, i32, i32) {
    %c0_i32 = arith.constant 0 : i32
    %c0_i32_0 = arith.constant 0 : i32
    return %arg0, %arg1, %c0_i32 : i32, i32, i32
  }
}

</mosaic_0001>

<llo_original>
// kernel: tpu_custom_call.1
$region0: #{tpu_custom_call.1}
  #allocation0 [shape = 'u32[]', space=smem, size = 0x4, offset = 0x4, fixed_abs, tag = 'smem constant byte address 0x4 - core index']
  #allocation1 [shape = 'u32[144,128]{1,0:T(1,128)}', space=vmem, size = 0x12000, scoped, tag = 'internal scratch']
  %s0 = inlined_call_operand.hbm [shape: f32[2,64,64], index: 0, kind: input, shape index: {}]
  %s1 = inlined_call_operand.hbm [shape: bf16[64,768], index: 1, kind: input, shape index: {}]
  %s2 = inlined_call_operand.vmem [shape: f32[1,768], index: 2, kind: input, shape index: {}]
  %s3 = inlined_call_operand.hbm [shape: bf16[64,768], index: 3, kind: input, shape index: {}]
  %s4 = inlined_call_operand.hbm [shape: bf16[2,64,768], index: 4, kind: output, shape index: {}]
  %s5 = sld [smem:[#allocation0]]
  $region61: #{tpu_custom_call.1} parent=0
    _
  %s7 = ssub.s32 1, %s5
  %s8 = scalar_select 0, %s7, %s5
  $region1: #{tpu_custom_call.1} parent=0
    #allocation2 [shape = 'u8[65536]{0}', space=vmem, size = 0x10000, scoped, tag = 'input window, operand 0']
    #allocation3 [shape = 's32[2]{0}', space=sflag, size = 0x8, scoped, tag = 'scoped memory for tpu_custom_call.1']
    #allocation4 [shape = 's32[2]{0}', space=sflag, size = 0x8, scoped, tag = 'scoped memory for tpu_custom_call.1']
    #allocation5 [shape = 'u8[98304]{0}', space=vmem, size = 0x18000, scoped, tag = 'input window, operand 1, single buffered']
    #allocation6 [shape = 's32[1]{0}', space=sflag, size = 0x4, scoped, tag = 'scoped memory for tpu_custom_call.1']
    #allocation7 [shape = 'u8[98304]{0}', space=vmem, size = 0x18000, scoped, tag = 'input window, operand 3, single buffered']
    #allocation8 [shape = 'u8[196608]{0}', space=vmem, size = 0x30000, scoped, tag = 'output window, operand 0']
    %9 = vsyncpa [#allocation3], 0
    %s10 = scalar_lea.sflag [#allocation3], 1
    %11 = vsyncpa %s10, 0
    %12 = vsyncpa [#allocation6], 0
    %13 = vsyncpa [#allocation4], 0
    %s14 = scalar_lea.sflag [#allocation4], 1
    %15 = vsyncpa %s14, 0
    loop: start=0, step=1, limit=4
    $region2: #{tpu_custom_call.1} parent=1 // loop_pre_header
      _
    $region3: #{tpu_custom_call.1} parent=1 // loop_header
      %s17 = sphi 0, %s21
      %p18 = scmp.ge.s32.totalorder %s17, 4
      %s24 = sphi 0, %s36
      %s25 = sphi 0, %s32
      %s26 = sphi 0, %s24
      %s27 = sphi 0, %s25
      %s28 = sphi 0, %s26
      %s29 = sphi 0, %s27
      %s41 = sphi 0, %s43
      %s44 = sphi 0, %s41
      %s45 = sphi 0, %s44
      %s61 = sphi 0, %s45
      %s65 = sphi 0, %s65
      %s67 = sphi 0, %s65
      %s68 = sphi 0, %s67
      %s82 = sphi 0, %s68
      %s86 = sphi 0, %s86
      %s88 = sphi 0, %s86
      %s89 = sphi 0, %s88
      %s103 = sphi 0, %s89
      %s109 = sphi 0, %s111
      %s112 = sphi 0, %s109
      %s113 = sphi 0, %s112
      %s129 = sphi 0, %s113
      %s137 = sphi 0, %s139
      %s140 = sphi 0, %s137
      %s141 = sphi 0, %s140
      %s157 = sphi 0, %s141
    $region4: #{tpu_custom_call.1} parent=1 // loop_header_branch
      %20 = sbr.rel (%p18) target = $region8
    $region5: #{tpu_custom_call.1} parent=1 // loop_body
      %s22 = ssub.s32 %s17, 1
      %s23 = ssub.s32 %s17, 2
      %s30 = sadd.s32 1, %s25
      %p31 = scmp.ge.s32.totalorder %s30, 1
      %s32 = scalar_select %p31, 0, %s30
      %s33 = sadd.s32 1, %s24
      %s34 = scalar_select %p31, %s33, %s24
      %p35 = scmp.ge.s32.totalorder %s34, 2
      %s36 = scalar_select %p35, 0, %s34
      %s37 = ssub.s32 %s24, %s36
      %s38 = ssub.s32 %s25, %s32
      %s39 = sor.u32 %s37, %s38
      %p40 = scmp.eq.s32.totalorder %s39, 0
      %s42 = sadd.s32 %s41, 1
      %s43 = scalar_select %p40, %s41, %s42
      %p46 = pneg %p40
      %p47 = scmp.eq.s32.totalorder %s17, 1
      %p48 = por %p46, %p47
      %p49 = scmp.ne.s32.totalorder %s41, %s44
      %p50 = scmp.eq.s32.totalorder %s17, 0
      %p51 = por %p49, %p50
      %p52 = scmp.ne.s32.totalorder %s41, %s44
      %p53 = scmp.eq.s32.totalorder %s22, 1
      %p54 = por %p52, %p53
      %p55 = scmp.ne.s32.totalorder %s44, %s45
      %p56 = scmp.eq.s32.totalorder %s22, 0
      %p57 = por %p55, %p56
      %p58 = scmp.ne.s32.totalorder %s44, %s45
      %p59 = scmp.eq.s32.totalorder %s23, 1
      %p60 = por %p58, %p59
      %p62 = scmp.ne.s32.totalorder %s45, %s61
      %p63 = scmp.eq.s32.totalorder %s23, 0
      %p64 = por %p62, %p63
      %s66 = sadd.s32 %s65, 1
      %p69 = scmp.eq.s32.totalorder %s17, 1
      %p70 = scmp.ne.s32.totalorder %s65, %s67
      %p71 = scmp.eq.s32.totalorder %s17, 0
      %p72 = por %p70, %p71
      %p73 = scmp.ne.s32.totalorder %s65, %s67
      %p74 = scmp.eq.s32.totalorder %s22, 1
      %p75 = por %p73, %p74
      %p76 = scmp.ne.s32.totalorder %s67, %s68
      %p77 = scmp.eq.s32.totalorder %s22, 0
      %p78 = por %p76, %p77
      %p79 = scmp.ne.s32.totalorder %s67, %s68
      %p80 = scmp.eq.s32.totalorder %s23, 1
      %p81 = por %p79, %p80
      %p83 = scmp.ne.s32.totalorder %s68, %s82
      %p84 = scmp.eq.s32.totalorder %s23, 0
      %p85 = por %p83, %p84
      %s87 = sadd.s32 %s86, 1
      %p90 = scmp.eq.s32.totalorder %s17, 1
      %p91 = scmp.ne.s32.totalorder %s86, %s88
      %p92 = scmp.eq.s32.totalorder %s17, 0
      %p93 = por %p91, %p92
      %p94 = scmp.ne.s32.totalorder %s86, %s88
      %p95 = scmp.eq.s32.totalorder %s22, 1
      %p96 = por %p94, %p95
      %p97 = scmp.ne.s32.totalorder %s88, %s89
      %p98 = scmp.eq.s32.totalorder %s22, 0
      %p99 = por %p97, %p98
      %p100 = scmp.ne.s32.totalorder %s88, %s89
      %p101 = scmp.eq.s32.totalorder %s23, 1
      %p102 = por %p100, %p101
      %p104 = scmp.ne.s32.totalorder %s89, %s103
      %p105 = scmp.eq.s32.totalorder %s23, 0
      %p106 = por %p104, %p105
      %s107 = ssub.s32 %s25, %s32
      %p108 = scmp.eq.s32.totalorder %s107, 0
      %s110 = sadd.s32 %s109, 1
      %s111 = scalar_select %p108, %s109, %s110
      %p114 = pneg %p108
      %p115 = scmp.eq.s32.totalorder %s17, 1
      %p116 = por %p114, %p115
      %p117 = scmp.ne.s32.totalorder %s109, %s112
      %p118 = scmp.eq.s32.totalorder %s17, 0
      %p119 = por %p117, %p118
      %p120 = scmp.ne.s32.totalorder %s109, %s112
      %p121 = scmp.eq.s32.totalorder %s22, 1
      %p122 = por %p120, %p121
      %p123 = scmp.ne.s32.totalorder %s112, %s113
      %p124 = scmp.eq.s32.totalorder %s22, 0
      %p125 = por %p123, %p124
      %p126 = scmp.ne.s32.totalorder %s112, %s113
      %p127 = scmp.eq.s32.totalorder %s23, 1
      %p128 = por %p126, %p127
      %p130 = scmp.ne.s32.totalorder %s113, %s129
      %p131 = scmp.eq.s32.totalorder %s23, 0
      %p132 = por %p130, %p131
      %s133 = ssub.s32 %s24, %s36
      %s134 = ssub.s32 %s25, %s32
      %s135 = sor.u32 %s133, %s134
      %p136 = scmp.eq.s32.totalorder %s135, 0
      %s138 = sadd.s32 %s137, 1
      %s139 = scalar_select %p136, %s137, %s138
      %p142 = pneg %p136
      %p143 = scmp.eq.s32.totalorder %s17, 1
      %p144 = por %p142, %p143
      %p145 = scmp.ne.s32.totalorder %s137, %s140
      %p146 = scmp.eq.s32.totalorder %s17, 0
      %p147 = por %p145, %p146
      %p148 = scmp.ne.s32.totalorder %s137, %s140
      %p149 = scmp.eq.s32.totalorder %s22, 1
      %p150 = por %p148, %p149
      %p151 = scmp.ne.s32.totalorder %s140, %s141
      %p152 = scmp.eq.s32.totalorder %s22, 0
      %p153 = por %p151, %p152
      %p154 = scmp.ne.s32.totalorder %s140, %s141
      %p155 = scmp.eq.s32.totalorder %s23, 1
      %p156 = por %p154, %p155
      %p158 = scmp.ne.s32.totalorder %s141, %s157
      %p159 = scmp.eq.s32.totalorder %s23, 0
      %p160 = por %p158, %p159
      %p161 = scmp.le.s32.totalorder 1, %s17
      %p162 = scmp.lt.s32.totalorder %s17, 3
      %p163 = pnand %p161, %p162
      %p164 = pneg %p163
      // Predicated region
      $region9: #{tpu_custom_call.1} parent=5 // pred_check
        _
      $region10: #{tpu_custom_call.1} parent=5 // pred_check_branch
        %166 = sbr.rel (%p163) target = $region12
      $region11: #{tpu_custom_call.1} parent=5 // pred_region
        %s167 = ssub.s32 %s17, 1
        // Predicated region
        $region13: #{tpu_custom_call.1} parent=11 // pred_check
          %p168 = pneg %p78
        $region14: #{tpu_custom_call.1} parent=11 // pred_check_branch
          %170 = sbr.rel (%p168) target = $region16
        $region15: #{tpu_custom_call.1} parent=11 // pred_region
          %s172 = ssub.s32 3072, 3072
          %173 = vsyncadd [#allocation6], %s172
          %s174 = sshll.u32 [#allocation5], 4
          %s175 = int_to_ptr.vmem [resolvable:$true] %s174
          %180 = dma.hbm_to_vmem [thread:$0]  %s1, 3072, %s175, [#allocation6], 384, 384, 24
        $region16: #{tpu_custom_call.1} parent=11 // pred_fallthru
          _
        // Predicated region
        $region17: #{tpu_custom_call.1} parent=11 // pred_check
          %p181 = pneg %p99
        $region18: #{tpu_custom_call.1} parent=11 // pred_check_branch
          %183 = sbr.rel (%p181) target = $region20
        $region19: #{tpu_custom_call.1} parent=11 // pred_region
          _
        $region20: #{tpu_custom_call.1} parent=11 // pred_fallthru
          _
        // Predicated region
        $region21: #{tpu_custom_call.1} parent=11 // pred_check
          %p184 = pneg %p125
        $region22: #{tpu_custom_call.1} parent=11 // pred_check_branch
          %186 = sbr.rel (%p184) target = $region24
        $region23: #{tpu_custom_call.1} parent=11 // pred_region
          %s187 = smul.u32 8, %s27
          %s189 = ssub.s32 3072, 3072
          %190 = vsyncadd [#allocation6], %s189
          %s191 = smul.addr %s187, 6
          %s192 = smul.addr %s191, 64
          %s193 = scalar_lea.hbm %s3, %s192
          %s194 = sshll.u32 [#allocation7], 4
          %s195 = int_to_ptr.vmem [resolvable:$true] %s194
          %200 = dma.hbm_to_vmem [thread:$0]  %s193, 3072, %s195, [#allocation6], 384, 384, 24
        $region24: #{tpu_custom_call.1} parent=11 // pred_fallthru
          _
      $region12: #{tpu_custom_call.1} parent=5 // pred_fallthru
        _
      %p201 = scmp.lt.s32.totalorder %s17, 2
      // Predicated region
      $region25: #{tpu_custom_call.1} parent=5 // pred_check
        %p202 = pneg %p201
      $region26: #{tpu_custom_call.1} parent=5 // pred_check_branch
        %204 = sbr.rel (%p202) target = $region28
      $region27: #{tpu_custom_call.1} parent=5 // pred_region
        // Predicated region
        $region29: #{tpu_custom_call.1} parent=27 // pred_check
          %p205 = pneg %p51
        $region30: #{tpu_custom_call.1} parent=27 // pred_check_branch
          %207 = sbr.rel (%p205) target = $region32
        $region31: #{tpu_custom_call.1} parent=27 // pred_region
          %s208 = sand.u32 %s41, 1
          %s209 = scalar_lea.sflag [#allocation3], %s208
          %s210 = sand.u32 %s41, 1
          %s211 = smul.addr %s210, 64
          %s212 = scalar_lea.vmem [#allocation2], %s211
          %s213 = smul.u32 8, %s25
          %s215 = ssub.s32 1024, 1024
          %216 = vsyncadd %s209, %s215
          %s217 = smul.addr %s24, 8
          %s218 = sadd.s32 %s213, %s217
          %s219 = smul.addr %s218, 128
          %s220 = scalar_lea.hbm %s0, %s219
          %s221 = sshll.u32 %s212, 4
          %s222 = int_to_ptr.vmem [resolvable:$true] %s221
          %227 = dma.hbm_to_vmem [thread:$0]  %s220, 1024, %s222, %s209, 128, 128, 8
        $region32: #{tpu_custom_call.1} parent=27 // pred_fallthru
          _
      $region28: #{tpu_custom_call.1} parent=5 // pred_fallthru
        _
      %p228 = scmp.le.s32.totalorder 1, %s17
      %p229 = scmp.lt.s32.totalorder %s17, 3
      %p230 = pnand %p228, %p229
      %p231 = pneg %p230
      // Predicated region
      $region33: #{tpu_custom_call.1} parent=5 // pred_check
        _
      $region34: #{tpu_custom_call.1} parent=5 // pred_check_branch
        %233 = sbr.rel (%p230) target = $region36
      $region35: #{tpu_custom_call.1} parent=5 // pred_region
        %s234 = ssub.s32 %s17, 1
        %s235 = sand.u32 %s44, 1
        %s236 = scalar_lea.sflag [#allocation3], %s235
        %s237 = sand.u32 %s44, 1
        %s238 = smul.addr %s237, 64
        %s239 = scalar_lea.vmem [#allocation2], %s238
        // Predicated region
        $region37: #{tpu_custom_call.1} parent=35 // pred_check
          %p240 = pneg %p57
        $region38: #{tpu_custom_call.1} parent=35 // pred_check_branch
          %242 = sbr.rel (%p240) target = $region40
        $region39: #{tpu_custom_call.1} parent=35 // pred_region
          %243 = dma.done %s236, 1024
        $region40: #{tpu_custom_call.1} parent=35 // pred_fallthru
          _
        // Predicated region
        $region41: #{tpu_custom_call.1} parent=35 // pred_check
          %p244 = pneg %p78
        $region42: #{tpu_custom_call.1} parent=35 // pred_check_branch
          %246 = sbr.rel (%p244) target = $region44
        $region43: #{tpu_custom_call.1} parent=35 // pred_region
          %247 = dma.done [#allocation6], 3072
        $region44: #{tpu_custom_call.1} parent=35 // pred_fallthru
          _
        // Predicated region
        $region45: #{tpu_custom_call.1} parent=35 // pred_check
          %p248 = pneg %p125
        $region46: #{tpu_custom_call.1} parent=35 // pred_check_branch
          %250 = sbr.rel (%p248) target = $region48
        $region47: #{tpu_custom_call.1} parent=35 // pred_region
          %251 = dma.done [#allocation6], 3072
        $region48: #{tpu_custom_call.1} parent=35 // pred_fallthru
          _
        %s252 = sand.u32 %s44, 1
        %s253 = scalar_lea.sflag [#allocation3], %s252
        %s254 = sand.u32 %s44, 1
        %s255 = smul.addr %s254, 64
        %s256 = scalar_lea.vmem [#allocation2], %s255
        %p257 = pneg %p57
        %p258 = pneg %p54
        %p259 = pneg %p78
        %p260 = pneg %p75
        %p261 = pneg %p99
        %p262 = pneg %p96
        %p263 = pneg %p125
        %p264 = pneg %p122
        %p265 = pneg %p153
        %p266 = pneg %p150
        %s267 = sand.u32 %s140, 1
        %s268 = scalar_lea.sflag [#allocation4], %s267
        %s269 = sand.u32 %s140, 1
        %s270 = smul.addr %s269, 192
        %s271 = scalar_lea.vmem [#allocation8], %s270
        %s272 = smul.u32 8, %s27
        %s273 = smul.u32 8, %s27
        %s274 = smul.u32 8, %s27
        %v276 = vld [vmem:[%s239] sm:$0xff]
        %v277 = vld [vmem:[%s239 + $0x8] sm:$0xff]
        %v278 = vld [vmem:[%s239 + $0x10] sm:$0xff]
        %v279 = vld [vmem:[%s239 + $0x18] sm:$0xff]
        %v280 = vld [vmem:[%s239 + $0x20] sm:$0xff]
        %v281 = vld [vmem:[%s239 + $0x28] sm:$0xff]
        %v282 = vld [vmem:[%s239 + $0x30] sm:$0xff]
        %v283 = vld [vmem:[%s239 + $0x38] sm:$0xff]
        %v284 = vpack.c.bf16 %v277, %v276
        %v285 = vpack.c.bf16 %v279, %v278
        %v286 = vpack.c.bf16 %v281, %v280
        %v287 = vpack.c.bf16 %v283, %v282
        %v288 = vld [vmem:[#allocation5] sm:$0xff]
        %v289 = vld [vmem:[#allocation5 + $0x8] sm:$0xff]
        %v290 = vld [vmem:[#allocation5 + $0x10] sm:$0xff]
        %v291 = vld [vmem:[#allocation5 + $0x18] sm:$0xff]
        %v292 = vld [vmem:[#allocation5 + $0x20] sm:$0xff]
        %v293 = vld [vmem:[#allocation5 + $0x28] sm:$0xff]
        %v294 = vld [vmem:[#allocation5 + $0x30] sm:$0xff]
        %v295 = vld [vmem:[#allocation5 + $0x38] sm:$0xff]
        %v296 = vld [vmem:[#allocation5 + $0x40] sm:$0xff]
        %v297 = vld [vmem:[#allocation5 + $0x48] sm:$0xff]
        %v298 = vld [vmem:[#allocation5 + $0x50] sm:$0xff]
        %v299 = vld [vmem:[#allocation5 + $0x58] sm:$0xff]
        %v300 = vld [vmem:[#allocation5 + $0x60] sm:$0xff]
        %v301 = vld [vmem:[#allocation5 + $0x68] sm:$0xff]
        %v302 = vld [vmem:[#allocation5 + $0x70] sm:$0xff]
        %v303 = vld [vmem:[#allocation5 + $0x78] sm:$0xff]
        %v304 = vld [vmem:[#allocation5 + $0x80] sm:$0xff]
        %v305 = vld [vmem:[#allocation5 + $0x88] sm:$0xff]
        %v306 = vld [vmem:[#allocation5 + $0x90] sm:$0xff]
        %v307 = vld [vmem:[#allocation5 + $0x98] sm:$0xff]
        %v308 = vld [vmem:[#allocation5 + $0xa0] sm:$0xff]
        %v309 = vld [vmem:[#allocation5 + $0xa8] sm:$0xff]
        %v310 = vld [vmem:[#allocation5 + $0xb0] sm:$0xff]
        %v311 = vld [vmem:[#allocation5 + $0xb8] sm:$0xff]
        %v312 = vld [vmem:[%s2] sm:$0x3f]
        %v314 = vlaneseq
        %v315 = vshrl.u32 %v314, 7
        %v316 = vsub.s32 0, %v315
        %v317 = vrot.slane %v312, %v316
        %v318 = vlaneseq
        %v319 = vshrl.u32 %v318, 7
        %v320 = vsub.s32 1, %v319
        %v321 = vrot.slane %v312, %v320
        %v322 = vlaneseq
        %v323 = vshrl.u32 %v322, 7
        %v324 = vsub.s32 2, %v323
        %v325 = vrot.slane %v312, %v324
        %v326 = vlaneseq
        %v327 = vshrl.u32 %v326, 7
        %v328 = vsub.s32 3, %v327
        %v329 = vrot.slane %v312, %v328
        %v330 = vlaneseq
        %v331 = vshrl.u32 %v330, 7
        %v332 = vsub.s32 4, %v331
        %v333 = vrot.slane %v312, %v332
        %v334 = vlaneseq
        %v335 = vshrl.u32 %v334, 7
        %v336 = vsub.s32 5, %v335
        %v337 = vrot.slane %v312, %v336
        %v368 = vunpack.c.l.b16 %v288
        %v369 = vunpack.c.h.b16 %v288
        %v370 = vunpack.c.l.b16 %v289
        %v371 = vunpack.c.h.b16 %v289
        %v372 = vunpack.c.l.b16 %v290
        %v373 = vunpack.c.h.b16 %v290
        %v374 = vunpack.c.l.b16 %v291
        %v375 = vunpack.c.h.b16 %v291
        %v376 = vunpack.c.l.b16 %v292
        %v377 = vunpack.c.h.b16 %v292
        %v378 = vunpack.c.l.b16 %v293
        %v379 = vunpack.c.h.b16 %v293
        %v380 = vunpack.c.l.b16 %v294
        %v381 = vunpack.c.h.b16 %v294
        %v382 = vunpack.c.l.b16 %v295
        %v383 = vunpack.c.h.b16 %v295
        %v384 = vunpack.c.l.b16 %v296
        %v385 = vunpack.c.h.b16 %v296
        %v386 = vunpack.c.l.b16 %v297
        %v387 = vunpack.c.h.b16 %v297
        %v388 = vunpack.c.l.b16 %v298
        %v389 = vunpack.c.h.b16 %v298
        %v390 = vunpack.c.l.b16 %v299
        %v391 = vunpack.c.h.b16 %v299
        %v392 = vunpack.c.l.b16 %v300
        %v393 = vunpack.c.h.b16 %v300
        %v394 = vunpack.c.l.b16 %v301
        %v395 = vunpack.c.h.b16 %v301
        %v396 = vunpack.c.l.b16 %v302
        %v397 = vunpack.c.h.b16 %v302
        %v398 = vunpack.c.l.b16 %v303
        %v399 = vunpack.c.h.b16 %v303
        %v400 = vunpack.c.l.b16 %v304
        %v401 = vunpack.c.h.b16 %v304
        %v402 = vunpack.c.l.b16 %v305
        %v403 = vunpack.c.h.b16 %v305
        %v404 = vunpack.c.l.b16 %v306
        %v405 = vunpack.c.h.b16 %v306
        %v406 = vunpack.c.l.b16 %v307
        %v407 = vunpack.c.h.b16 %v307
        %v408 = vunpack.c.l.b16 %v308
        %v409 = vunpack.c.h.b16 %v308
        %v410 = vunpack.c.l.b16 %v309
        %v411 = vunpack.c.h.b16 %v309
        %v412 = vunpack.c.l.b16 %v310
        %v413 = vunpack.c.h.b16 %v310
        %v414 = vunpack.c.l.b16 %v311
        %v415 = vunpack.c.h.b16 %v311
        %v416 = vpack.c.b16 %v374, %v368
        %v417 = vpack.c.b16 %v375, %v369
        %v418 = vpack.c.b16 %v376, %v370
        %v419 = vpack.c.b16 %v377, %v371
        %v420 = vpack.c.b16 %v378, %v372
        %v421 = vpack.c.b16 %v379, %v373
        %v422 = vpack.c.b16 %v386, %v380
        %v423 = vpack.c.b16 %v387, %v381
        %v424 = vpack.c.b16 %v388, %v382
        %v425 = vpack.c.b16 %v389, %v383
        %v426 = vpack.c.b16 %v390, %v384
        %v427 = vpack.c.b16 %v391, %v385
        %v428 = vpack.c.b16 %v398, %v392
        %v429 = vpack.c.b16 %v399, %v393
        %v430 = vpack.c.b16 %v400, %v394
        %v431 = vpack.c.b16 %v401, %v395
        %v432 = vpack.c.b16 %v402, %v396
        %v433 = vpack.c.b16 %v403, %v397
        %v434 = vpack.c.b16 %v410, %v404
        %v435 = vpack.c.b16 %v411, %v405
        %v436 = vpack.c.b16 %v412, %v406
        %v437 = vpack.c.b16 %v413, %v407
        %v438 = vpack.c.b16 %v414, %v408
        %v439 = vpack.c.b16 %v415, %v409
        %vm464 = vcmask 523264
        %v466 = vsel %vm464, %v284, 0
        %v469 = vsel %vm464, %v285, 0
        %v472 = vsel %vm464, %v286, 0
        %v475 = vsel %vm464, %v287, 0
        %477 = vmatprep.subr.bf16.mxu0 %v417
        %478 = vmatpush1.bf16.msra.mxu0 %v416
        %479 = vmatprep.subr.bf16.mxu0 %v423
        %480 = vmatpush1.bf16.msra.mxu0 %v422
        %481 = vmatprep.subr.bf16.mxu0 %v429
        %482 = vmatpush1.bf16.msra.mxu0 %v428
        %483 = vmatprep.subr.bf16.mxu0 %v435
        %484 = vmatpush1.bf16.msra.mxu0 %v434
        %485 = vmatprep.subr.bf16.mxu0 0
        %486 = vmatpush1.bf16.msra.mxu0 0
        %487 = vmatprep.subr.bf16.mxu0 0
        %488 = vmatpush1.bf16.msra.mxu0 0
        %489 = vmatprep.subr.bf16.mxu0 0
        %490 = vmatpush1.bf16.msra.mxu0 0
        %491 = vmatprep.subr.bf16.mxu0 0
        %492 = vmatpush1.bf16.msra.mxu0 0
        %493 = vmatprep.subr.bf16.mxu0 0
        %494 = vmatpush1.bf16.msra.mxu0 0
        %495 = vmatprep.subr.bf16.mxu0 0
        %496 = vmatpush1.bf16.msra.mxu0 0
        %497 = vmatprep.subr.bf16.mxu0 0
        %498 = vmatpush1.bf16.msra.mxu0 0
        %499 = vmatprep.subr.bf16.mxu0 0
        %500 = vmatpush1.bf16.msra.mxu0 0
        %501 = vmatprep.subr.bf16.mxu0 0
        %502 = vmatpush1.bf16.msra.mxu0 0
        %503 = vmatprep.subr.bf16.mxu0 0
        %504 = vmatpush1.bf16.msra.mxu0 0
        %505 = vmatprep.subr.bf16.mxu0 0
        %506 = vmatpush1.bf16.msra.mxu0 0
        %507 = vmatprep.subr.bf16.mxu0 0
        %508 = vmatpush1.bf16.msra.mxu0 0
        %509 = vmatprep.mubr.bf16.mxu0 0
        %510 = vmatmul.mubr.bf16.gmra.mrb[0].mxu0 %v466
        %v511 = vpop.f32.mrb[0].mxu0
        %v512 = vadd.f32 %v317, %v511
        %v513 = vpop.f32.mrb[0].mxu0
        %v514 = vadd.f32 %v321, %v513
        %v515 = vpop.f32.mrb[0].mxu0
        %v516 = vadd.f32 %v317, %v515
        %v517 = vpop.f32.mrb[0].mxu0
        %v518 = vadd.f32 %v321, %v517
        %519 = vmatprep.mubr.bf16.mxu0 0
        %520 = vmatmul.mubr.bf16.gmra.mrb[0].mxu0 %v469
        %v521 = vpop.f32.mrb[0].mxu0
        %v522 = vadd.f32 %v317, %v521
        %v523 = vpop.f32.mrb[0].mxu0
        %v524 = vadd.f32 %v321, %v523
        %v525 = vpop.f32.mrb[0].mxu0
        %v526 = vadd.f32 %v317, %v525
        %v527 = vpop.f32.mrb[0].mxu0
        %v528 = vadd.f32 %v321, %v527
        %529 = vmatprep.mubr.bf16.mxu0 0
        %530 = vmatmul.mubr.bf16.gmra.mrb[0].mxu0 %v472
        %v531 = vpop.f32.mrb[0].mxu0
        %v532 = vadd.f32 %v317, %v531
        %v533 = vpop.f32.mrb[0].mxu0
        %v534 = vadd.f32 %v321, %v533
        %v535 = vpop.f32.mrb[0].mxu0
        %v536 = vadd.f32 %v317, %v535
        %v537 = vpop.f32.mrb[0].mxu0
        %v538 = vadd.f32 %v321, %v537
        %539 = vmatprep.mubr.bf16.mxu0 0
        %540 = vmatmul.mubr.bf16.gmra.mrb[0].mxu0 %v475
        %v541 = vpop.f32.mrb[0].mxu0
        %v542 = vadd.f32 %v317, %v541
        %v543 = vpop.f32.mrb[0].mxu0
        %v544 = vadd.f32 %v321, %v543
        %v545 = vpop.f32.mrb[0].mxu0
        %v546 = vadd.f32 %v317, %v545
        %v547 = vpop.f32.mrb[0].mxu0
        %v548 = vadd.f32 %v321, %v547
        %549 = vdwg.mxu0
        %550 = vmatprep.subr.bf16.mxu0 %v419
        %551 = vmatpush1.bf16.msra.mxu0 %v418
        %552 = vmatprep.subr.bf16.mxu0 %v425
        %553 = vmatpush1.bf16.msra.mxu0 %v424
        %554 = vmatprep.subr.bf16.mxu0 %v431
        %555 = vmatpush1.bf16.msra.mxu0 %v430
        %556 = vmatprep.subr.bf16.mxu0 %v437
        %557 = vmatpush1.bf16.msra.mxu0 %v436
        %558 = vmatprep.subr.bf16.mxu0 0
        %559 = vmatpush1.bf16.msra.mxu0 0
        %560 = vmatprep.subr.bf16.mxu0 0
        %561 = vmatpush1.bf16.msra.mxu0 0
        %562 = vmatprep.subr.bf16.mxu0 0
        %563 = vmatpush1.bf16.msra.mxu0 0
        %564 = vmatprep.subr.bf16.mxu0 0
        %565 = vmatpush1.bf16.msra.mxu0 0
        %566 = vmatprep.subr.bf16.mxu0 0
        %567 = vmatpush1.bf16.msra.mxu0 0
        %568 = vmatprep.subr.bf16.mxu0 0
        %569 = vmatpush1.bf16.msra.mxu0 0
        %570 = vmatprep.subr.bf16.mxu0 0
        %571 = vmatpush1.bf16.msra.mxu0 0
        %572 = vmatprep.subr.bf16.mxu0 0
        %573 = vmatpush1.bf16.msra.mxu0 0
        %574 = vmatprep.subr.bf16.mxu0 0
        %575 = vmatpush1.bf16.msra.mxu0 0
        %576 = vmatprep.subr.bf16.mxu0 0
        %577 = vmatpush1.bf16.msra.mxu0 0
        %578 = vmatprep.subr.bf16.mxu0 0
        %579 = vmatpush1.bf16.msra.mxu0 0
        %580 = vmatprep.subr.bf16.mxu0 0
        %581 = vmatpush1.bf16.msra.mxu0 0
        %582 = vmatprep.mubr.bf16.mxu0 0
        %583 = vmatmul.mubr.bf16.gmra.mrb[0].mxu0 %v466
        %v584 = vpop.f32.mrb[0].mxu0
        %v585 = vadd.f32 %v325, %v584
        %v586 = vpop.f32.mrb[0].mxu0
        %v587 = vadd.f32 %v329, %v586
        %v588 = vpop.f32.mrb[0].mxu0
        %v589 = vadd.f32 %v325, %v588
        %v590 = vpop.f32.mrb[0].mxu0
        %v591 = vadd.f32 %v329, %v590
        %592 = vmatprep.mubr.bf16.mxu0 0
        %593 = vmatmul.mubr.bf16.gmra.mrb[0].mxu0 %v469
        %v594 = vpop.f32.mrb[0].mxu0
        %v595 = vadd.f32 %v325, %v594
        %v596 = vpop.f32.mrb[0].mxu0
        %v597 = vadd.f32 %v329, %v596
        %v598 = vpop.f32.mrb[0].mxu0
        %v599 = vadd.f32 %v325, %v598
        %v600 = vpop.f32.mrb[0].mxu0
        %v601 = vadd.f32 %v329, %v600
        %602 = vmatprep.mubr.bf16.mxu0 0
        %603 = vmatmul.mubr.bf16.gmra.mrb[0].mxu0 %v472
        %v604 = vpop.f32.mrb[0].mxu0
        %v605 = vadd.f32 %v325, %v604
        %v606 = vpop.f32.mrb[0].mxu0
        %v607 = vadd.f32 %v329, %v606
        %v608 = vpop.f32.mrb[0].mxu0
        %v609 = vadd.f32 %v325, %v608
        %v610 = vpop.f32.mrb[0].mxu0
        %v611 = vadd.f32 %v329, %v610
        %612 = vmatprep.mubr.bf16.mxu0 0
        %613 = vmatmul.mubr.bf16.gmra.mrb[0].mxu0 %v475
        %v614 = vpop.f32.mrb[0].mxu0
        %v615 = vadd.f32 %v325, %v614
        %v616 = vpop.f32.mrb[0].mxu0
        %v617 = vadd.f32 %v329, %v616
        %v618 = vpop.f32.mrb[0].mxu0
        %v619 = vadd.f32 %v325, %v618
        %v620 = vpop.f32.mrb[0].mxu0
        %v621 = vadd.f32 %v329, %v620
        %622 = vdwg.mxu0
        %623 = vmatprep.subr.bf16.mxu0 %v421
        %624 = vmatpush1.bf16.msra.mxu0 %v420
        %625 = vmatprep.subr.bf16.mxu0 %v427
        %626 = vmatpush1.bf16.msra.mxu0 %v426
        %627 = vmatprep.subr.bf16.mxu0 %v433
        %628 = vmatpush1.bf16.msra.mxu0 %v432
        %629 = vmatprep.subr.bf16.mxu0 %v439
        %630 = vmatpush1.bf16.msra.mxu0 %v438
        %631 = vmatprep.subr.bf16.mxu0 0
        %632 = vmatpush1.bf16.msra.mxu0 0
        %633 = vmatprep.subr.bf16.mxu0 0
        %634 = vmatpush1.bf16.msra.mxu0 0
        %635 = vmatprep.subr.bf16.mxu0 0
        %636 = vmatpush1.bf16.msra.mxu0 0
        %637 = vmatprep.subr.bf16.mxu0 0
        %638 = vmatpush1.bf16.msra.mxu0 0
        %639 = vmatprep.subr.bf16.mxu0 0
        %640 = vmatpush1.bf16.msra.mxu0 0
        %641 = vmatprep.subr.bf16.mxu0 0
        %642 = vmatpush1.bf16.msra.mxu0 0
        %643 = vmatprep.subr.bf16.mxu0 0
        %644 = vmatpush1.bf16.msra.mxu0 0
        %645 = vmatprep.subr.bf16.mxu0 0
        %646 = vmatpush1.bf16.msra.mxu0 0
        %647 = vmatprep.subr.bf16.mxu0 0
        %648 = vmatpush1.bf16.msra.mxu0 0
        %649 = vmatprep.subr.bf16.mxu0 0
        %650 = vmatpush1.bf16.msra.mxu0 0
        %651 = vmatprep.subr.bf16.mxu0 0
        %652 = vmatpush1.bf16.msra.mxu0 0
        %653 = vmatprep.subr.bf16.mxu0 0
        %654 = vmatpush1.bf16.msra.mxu0 0
        %655 = vmatprep.mubr.bf16.mxu0 0
        %656 = vmatmul.mubr.bf16.gmra.mrb[0].mxu0 %v466
        %v657 = vpop.f32.mrb[0].mxu0
        %v658 = vadd.f32 %v333, %v657
        %v659 = vpop.f32.mrb[0].mxu0
        %v660 = vadd.f32 %v337, %v659
        %v661 = vpop.f32.mrb[0].mxu0
        %v662 = vadd.f32 %v333, %v661
        %v663 = vpop.f32.mrb[0].mxu0
        %v664 = vadd.f32 %v337, %v663
        %665 = vmatprep.mubr.bf16.mxu0 0
        %666 = vmatmul.mubr.bf16.gmra.mrb[0].mxu0 %v469
        %v667 = vpop.f32.mrb[0].mxu0
        %v668 = vadd.f32 %v333, %v667
        %v669 = vpop.f32.mrb[0].mxu0
        %v670 = vadd.f32 %v337, %v669
        %v671 = vpop.f32.mrb[0].mxu0
        %v672 = vadd.f32 %v333, %v671
        %v673 = vpop.f32.mrb[0].mxu0
        %v674 = vadd.f32 %v337, %v673
        %675 = vmatprep.mubr.bf16.mxu0 0
        %676 = vmatmul.mubr.bf16.gmra.mrb[0].mxu0 %v472
        %v677 = vpop.f32.mrb[0].mxu0
        %v678 = vadd.f32 %v333, %v677
        %v679 = vpop.f32.mrb[0].mxu0
        %v680 = vadd.f32 %v337, %v679
        %v681 = vpop.f32.mrb[0].mxu0
        %v682 = vadd.f32 %v333, %v681
        %v683 = vpop.f32.mrb[0].mxu0
        %v684 = vadd.f32 %v337, %v683
        %685 = vmatprep.mubr.bf16.mxu0 0
        %686 = vmatmul.mubr.bf16.gmra.mrb[0].mxu0 %v475
        %v687 = vpop.f32.mrb[0].mxu0
        %v688 = vadd.f32 %v333, %v687
        %v689 = vpop.f32.mrb[0].mxu0
        %v690 = vadd.f32 %v337, %v689
        %v691 = vpop.f32.mrb[0].mxu0
        %v692 = vadd.f32 %v333, %v691
        %v693 = vpop.f32.mrb[0].mxu0
        %v694 = vadd.f32 %v337, %v693
        %695 = vdwg.mxu0
        %v696 = vld [vmem:[#allocation7] sm:$0xff]
        %v697 = vld [vmem:[#allocation7 + $0x8] sm:$0xff]
        %v698 = vld [vmem:[#allocation7 + $0x10] sm:$0xff]
        %v699 = vld [vmem:[#allocation7 + $0x18] sm:$0xff]
        %v700 = vld [vmem:[#allocation7 + $0x20] sm:$0xff]
        %v701 = vld [vmem:[#allocation7 + $0x28] sm:$0xff]
        %v702 = vld [vmem:[#allocation7 + $0x30] sm:$0xff]
        %v703 = vld [vmem:[#allocation7 + $0x38] sm:$0xff]
        %v704 = vld [vmem:[#allocation7 + $0x40] sm:$0xff]
        %v705 = vld [vmem:[#allocation7 + $0x48] sm:$0xff]
        %v706 = vld [vmem:[#allocation7 + $0x50] sm:$0xff]
        %v707 = vld [vmem:[#allocation7 + $0x58] sm:$0xff]
        %v708 = vld [vmem:[#allocation7 + $0x60] sm:$0xff]
        %v709 = vld [vmem:[#allocation7 + $0x68] sm:$0xff]
        %v710 = vld [vmem:[#allocation7 + $0x70] sm:$0xff]
        %v711 = vld [vmem:[#allocation7 + $0x78] sm:$0xff]
        %v712 = vld [vmem:[#allocation7 + $0x80] sm:$0xff]
        %v713 = vld [vmem:[#allocation7 + $0x88] sm:$0xff]
        %v714 = vld [vmem:[#allocation7 + $0x90] sm:$0xff]
        %v715 = vld [vmem:[#allocation7 + $0x98] sm:$0xff]
        %v716 = vld [vmem:[#allocation7 + $0xa0] sm:$0xff]
        %v717 = vld [vmem:[#allocation7 + $0xa8] sm:$0xff]
        %v718 = vld [vmem:[#allocation7 + $0xb0] sm:$0xff]
        %v719 = vld [vmem:[#allocation7 + $0xb8] sm:$0xff]
        %v720 = vunpack.c.l.bf16 %v696
        %v721 = vunpack.c.h.bf16 %v696
        %v722 = vunpack.c.l.bf16 %v697
        %v723 = vunpack.c.h.bf16 %v697
        %v724 = vunpack.c.l.bf16 %v698
        %v725 = vunpack.c.h.bf16 %v698
        %v726 = vunpack.c.l.bf16 %v699
        %v727 = vunpack.c.h.bf16 %v699
        %v728 = vunpack.c.l.bf16 %v700
        %v729 = vunpack.c.h.bf16 %v700
        %v730 = vunpack.c.l.bf16 %v701
        %v731 = vunpack.c.h.bf16 %v701
        %v732 = vunpack.c.l.bf16 %v702
        %v733 = vunpack.c.h.bf16 %v702
        %v734 = vunpack.c.l.bf16 %v703
        %v735 = vunpack.c.h.bf16 %v703
        %v736 = vunpack.c.l.bf16 %v704
        %v737 = vunpack.c.h.bf16 %v704
        %v738 = vunpack.c.l.bf16 %v705
        %v739 = vunpack.c.h.bf16 %v705
        %v740 = vunpack.c.l.bf16 %v706
        %v741 = vunpack.c.h.bf16 %v706
        %v742 = vunpack.c.l.bf16 %v707
        %v743 = vunpack.c.h.bf16 %v707
        %v744 = vunpack.c.l.bf16 %v708
        %v745 = vunpack.c.h.bf16 %v708
        %v746 = vunpack.c.l.bf16 %v709
        %v747 = vunpack.c.h.bf16 %v709
        %v748 = vunpack.c.l.bf16 %v710
        %v749 = vunpack.c.h.bf16 %v710
        %v750 = vunpack.c.l.bf16 %v711
        %v751 = vunpack.c.h.bf16 %v711
        %v752 = vunpack.c.l.bf16 %v712
        %v753 = vunpack.c.h.bf16 %v712
        %v754 = vunpack.c.l.bf16 %v713
        %v755 = vunpack.c.h.bf16 %v713
        %v756 = vunpack.c.l.bf16 %v714
        %v757 = vunpack.c.h.bf16 %v714
        %v758 = vunpack.c.l.bf16 %v715
        %v759 = vunpack.c.h.bf16 %v715
        %v760 = vunpack.c.l.bf16 %v716
        %v761 = vunpack.c.h.bf16 %v716
        %v762 = vunpack.c.l.bf16 %v717
        %v763 = vunpack.c.h.bf16 %v717
        %v764 = vunpack.c.l.bf16 %v718
        %v765 = vunpack.c.h.bf16 %v718
        %v766 = vunpack.c.l.bf16 %v719
        %v767 = vunpack.c.h.bf16 %v719
        %v768 = vadd.f32 %v512, %v720
        %v769 = vadd.f32 %v514, %v721
        %v770 = vadd.f32 %v585, %v722
        %v771 = vadd.f32 %v587, %v723
        %v772 = vadd.f32 %v658, %v724
        %v773 = vadd.f32 %v660, %v725
        %v774 = vadd.f32 %v516, %v726
        %v775 = vadd.f32 %v518, %v727
        %v776 = vadd.f32 %v589, %v728
        %v777 = vadd.f32 %v591, %v729
        %v778 = vadd.f32 %v662, %v730
        %v779 = vadd.f32 %v664, %v731
        %v780 = vadd.f32 %v522, %v732
        %v781 = vadd.f32 %v524, %v733
        %v782 = vadd.f32 %v595, %v734
        %v783 = vadd.f32 %v597, %v735
        %v784 = vadd.f32 %v668, %v736
        %v785 = vadd.f32 %v670, %v737
        %v786 = vadd.f32 %v526, %v738
        %v787 = vadd.f32 %v528, %v739
        %v788 = vadd.f32 %v599, %v740
        %v789 = vadd.f32 %v601, %v741
        %v790 = vadd.f32 %v672, %v742
        %v791 = vadd.f32 %v674, %v743
        %v792 = vadd.f32 %v532, %v744
        %v793 = vadd.f32 %v534, %v745
        %v794 = vadd.f32 %v605, %v746
        %v795 = vadd.f32 %v607, %v747
        %v796 = vadd.f32 %v678, %v748
        %v797 = vadd.f32 %v680, %v749
        %v798 = vadd.f32 %v536, %v750
        %v799 = vadd.f32 %v538, %v751
        %v800 = vadd.f32 %v609, %v752
        %v801 = vadd.f32 %v611, %v753
        %v802 = vadd.f32 %v682, %v754
        %v803 = vadd.f32 %v684, %v755
        %v804 = vadd.f32 %v542, %v756
        %v805 = vadd.f32 %v544, %v757
        %v806 = vadd.f32 %v615, %v758
        %v807 = vadd.f32 %v617, %v759
        %v808 = vadd.f32 %v688, %v760
        %v809 = vadd.f32 %v690, %v761
        %v810 = vadd.f32 %v546, %v762
        %v811 = vadd.f32 %v548, %v763
        %v812 = vadd.f32 %v619, %v764
        %v813 = vadd.f32 %v621, %v765
        %v814 = vadd.f32 %v692, %v766
        %v815 = vadd.f32 %v694, %v767
        %v816 = vpack.c.bf16 %v774, %v768
        %v817 = vpack.c.bf16 %v775, %v769
        %v818 = vpack.c.bf16 %v776, %v770
        %v819 = vpack.c.bf16 %v777, %v771
        %v820 = vpack.c.bf16 %v778, %v772
        %v821 = vpack.c.bf16 %v779, %v773
        %v822 = vpack.c.bf16 %v786, %v780
        %v823 = vpack.c.bf16 %v787, %v781
        %v824 = vpack.c.bf16 %v788, %v782
        %v825 = vpack.c.bf16 %v789, %v783
        %v826 = vpack.c.bf16 %v790, %v784
        %v827 = vpack.c.bf16 %v791, %v785
        %v828 = vpack.c.bf16 %v798, %v792
        %v829 = vpack.c.bf16 %v799, %v793
        %v830 = vpack.c.bf16 %v800, %v794
        %v831 = vpack.c.bf16 %v801, %v795
        %v832 = vpack.c.bf16 %v802, %v796
        %v833 = vpack.c.bf16 %v803, %v797
        %v834 = vpack.c.bf16 %v810, %v804
        %v835 = vpack.c.bf16 %v811, %v805
        %v836 = vpack.c.bf16 %v812, %v806
        %v837 = vpack.c.bf16 %v813, %v807
        %v838 = vpack.c.bf16 %v814, %v808
        %v839 = vpack.c.bf16 %v815, %v809
        %v864 = vunpack.c.l.b16 %v816
        %v865 = vunpack.c.l.b16 %v817
        %v866 = vunpack.c.l.b16 %v818
        %v867 = vunpack.c.l.b16 %v819
        %v868 = vunpack.c.l.b16 %v820
        %v869 = vunpack.c.l.b16 %v821
        %v870 = vunpack.c.h.b16 %v816
        %v871 = vunpack.c.h.b16 %v817
        %v872 = vunpack.c.h.b16 %v818
        %v873 = vunpack.c.h.b16 %v819
        %v874 = vunpack.c.h.b16 %v820
        %v875 = vunpack.c.h.b16 %v821
        %v876 = vunpack.c.l.b16 %v822
        %v877 = vunpack.c.l.b16 %v823
        %v878 = vunpack.c.l.b16 %v824
        %v879 = vunpack.c.l.b16 %v825
        %v880 = vunpack.c.l.b16 %v826
        %v881 = vunpack.c.l.b16 %v827
        %v882 = vunpack.c.h.b16 %v822
        %v883 = vunpack.c.h.b16 %v823
        %v884 = vunpack.c.h.b16 %v824
        %v885 = vunpack.c.h.b16 %v825
        %v886 = vunpack.c.h.b16 %v826
        %v887 = vunpack.c.h.b16 %v827
        %v888 = vunpack.c.l.b16 %v828
        %v889 = vunpack.c.l.b16 %v829
        %v890 = vunpack.c.l.b16 %v830
        %v891 = vunpack.c.l.b16 %v831
        %v892 = vunpack.c.l.b16 %v832
        %v893 = vunpack.c.l.b16 %v833
        %v894 = vunpack.c.h.b16 %v828
        %v895 = vunpack.c.h.b16 %v829
        %v896 = vunpack.c.h.b16 %v830
        %v897 = vunpack.c.h.b16 %v831
        %v898 = vunpack.c.h.b16 %v832
        %v899 = vunpack.c.h.b16 %v833
        %v900 = vunpack.c.l.b16 %v834
        %v901 = vunpack.c.l.b16 %v835
        %v902 = vunpack.c.l.b16 %v836
        %v903 = vunpack.c.l.b16 %v837
        %v904 = vunpack.c.l.b16 %v838
        %v905 = vunpack.c.l.b16 %v839
        %v906 = vunpack.c.h.b16 %v834
        %v907 = vunpack.c.h.b16 %v835
        %v908 = vunpack.c.h.b16 %v836
        %v909 = vunpack.c.h.b16 %v837
        %v910 = vunpack.c.h.b16 %v838
        %v911 = vunpack.c.h.b16 %v839
        %v912 = vpack.c.b16 %v865, %v864
        %v913 = vpack.c.b16 %v867, %v866
        %v914 = vpack.c.b16 %v869, %v868
        %v915 = vpack.c.b16 %v871, %v870
        %v916 = vpack.c.b16 %v873, %v872
        %v917 = vpack.c.b16 %v875, %v874
        %v918 = vpack.c.b16 %v877, %v876
        %v919 = vpack.c.b16 %v879, %v878
        %v920 = vpack.c.b16 %v881, %v880
        %v921 = vpack.c.b16 %v883, %v882
        %v922 = vpack.c.b16 %v885, %v884
        %v923 = vpack.c.b16 %v887, %v886
        %v924 = vpack.c.b16 %v889, %v888
        %v925 = vpack.c.b16 %v891, %v890
        %v926 = vpack.c.b16 %v893, %v892
        %v927 = vpack.c.b16 %v895, %v894
        %v928 = vpack.c.b16 %v897, %v896
        %v929 = vpack.c.b16 %v899, %v898
        %v930 = vpack.c.b16 %v901, %v900
        %v931 = vpack.c.b16 %v903, %v902
        %v932 = vpack.c.b16 %v905, %v904
        %v933 = vpack.c.b16 %v907, %v906
        %v934 = vpack.c.b16 %v909, %v908
        %v935 = vpack.c.b16 %v911, %v910
        %960 = vst [vmem:[%s271] sm:$0xff] %v912
        %961 = vst [vmem:[%s271 + $0x8] sm:$0xff] %v913
        %962 = vst [vmem:[%s271 + $0x10] sm:$0xff] %v914
        %963 = vst [vmem:[%s271 + $0x18] sm:$0xff] %v915
        %964 = vst [vmem:[%s271 + $0x20] sm:$0xff] %v916
        %965 = vst [vmem:[%s271 + $0x28] sm:$0xff] %v917
        %966 = vst [vmem:[%s271 + $0x30] sm:$0xff] %v918
        %967 = vst [vmem:[%s271 + $0x38] sm:$0xff] %v919
        %968 = vst [vmem:[%s271 + $0x40] sm:$0xff] %v920
        %969 = vst [vmem:[%s271 + $0x48] sm:$0xff] %v921
        %970 = vst [vmem:[%s271 + $0x50] sm:$0xff] %v922
        %971 = vst [vmem:[%s271 + $0x58] sm:$0xff] %v923
        %972 = vst [vmem:[%s271 + $0x60] sm:$0xff] %v924
        %973 = vst [vmem:[%s271 + $0x68] sm:$0xff] %v925
        %974 = vst [vmem:[%s271 + $0x70] sm:$0xff] %v926
        %975 = vst [vmem:[%s271 + $0x78] sm:$0xff] %v927
        %976 = vst [vmem:[%s271 + $0x80] sm:$0xff] %v928
        %977 = vst [vmem:[%s271 + $0x88] sm:$0xff] %v929
        %978 = vst [vmem:[%s271 + $0x90] sm:$0xff] %v930
        %979 = vst [vmem:[%s271 + $0x98] sm:$0xff] %v931
        %980 = vst [vmem:[%s271 + $0xa0] sm:$0xff] %v932
        %981 = vst [vmem:[%s271 + $0xa8] sm:$0xff] %v933
        %982 = vst [vmem:[%s271 + $0xb0] sm:$0xff] %v934
        %983 = vst [vmem:[%s271 + $0xb8] sm:$0xff] %v935
        %s984 = sand.u32 %s140, 1
        %s985 = scalar_lea.sflag [#allocation4], %s984
        %s986 = sand.u32 %s140, 1
        %s987 = smul.addr %s986, 192
        %s988 = scalar_lea.vmem [#allocation8], %s987
        // Predicated region
        $region49: #{tpu_custom_call.1} parent=35 // pred_check
          %p989 = pneg %p150
        $region50: #{tpu_custom_call.1} parent=35 // pred_check_branch
          %991 = sbr.rel (%p989) target = $region52
        $region51: #{tpu_custom_call.1} parent=35 // pred_region
          %s992 = smul.u32 8, %s27
          %s994 = ssub.s32 3072, 3072
          %995 = vsyncadd %s985, %s994
          %s996 = smul.addr %s992, 6
          %s997 = smul.addr %s26, 48
          %s998 = sadd.s32 %s996, %s997
          %s999 = smul.addr %s998, 64
          %s1000 = scalar_lea.hbm %s4, %s999
          %s1001 = sshll.u32 %s988, 4
          %s1002 = int_to_ptr.vmem [resolvable:$true] %s1001
          %1007 = dma.vmem_to_hbm [thread:$0]  %s1002, 3072, %s1000, %s985, 384, 384, 24
        $region52: #{tpu_custom_call.1} parent=35 // pred_fallthru
          _
      $region36: #{tpu_custom_call.1} parent=5 // pred_fallthru
        _
      %p1008 = scmp.le.s32.totalorder 2, %s17
      // Predicated region
      $region53: #{tpu_custom_call.1} parent=5 // pred_check
        %p1009 = pneg %p1008
      $region54: #{tpu_custom_call.1} parent=5 // pred_check_branch
        %1011 = sbr.rel (%p1009) target = $region56
      $region55: #{tpu_custom_call.1} parent=5 // pred_region
        %s1012 = ssub.s32 %s17, 2
        // Predicated region
        $region57: #{tpu_custom_call.1} parent=55 // pred_check
          %p1013 = pneg %p156
        $region58: #{tpu_custom_call.1} parent=55 // pred_check_branch
          %1015 = sbr.rel (%p1013) target = $region60
        $region59: #{tpu_custom_call.1} parent=55 // pred_region
          %s1016 = sand.u32 %s141, 1
          %s1017 = scalar_lea.sflag [#allocation4], %s1016
          %s1018 = sand.u32 %s141, 1
          %s1019 = smul.addr %s1018, 192
          %s1020 = scalar_lea.vmem [#allocation8], %s1019
          %1021 = dma.done %s1017, 3072
        $region60: #{tpu_custom_call.1} parent=55 // pred_fallthru
          _
      $region56: #{tpu_custom_call.1} parent=5 // pred_fallthru
        _
    $region6: #{tpu_custom_call.1} parent=1 // loop_footer
      %s21 = sadd.s32 1, %s17
    $region7: #{tpu_custom_call.1} parent=1 // loop_footer_branch
      %16 = sbr.rel target = $region3
    $region8: #{tpu_custom_call.1} parent=1 // loop_exit
      _
    %1022 = vsyncpa [#allocation3], 1
    %s1023 = scalar_lea.sflag [#allocation3], 1
    %1024 = vsyncpa %s1023, 1
    %1025 = vsyncpa [#allocation6], 1
    %1026 = vsyncpa [#allocation4], 1
    %s1027 = scalar_lea.sflag [#allocation4], 1
    %1028 = vsyncpa %s1027, 1

</llo_original>
